<compile_context>
chip_gen: v5e
topology: v5e:2x2
jax: 0.10.0
libtpu: 0.0.40
codegen_flags: <defaults>
</compile_context>

<pallas_src>
import jax
import jax.numpy as jnp
from jax.experimental import pallas as pl
from jax.experimental.pallas import tpu as pltpu


def _round_up(x, m):
    return ((x + m - 1) // m) * m


def head_forward(x0, w1, b1, w2, b2, *, t_tile=None, b_tile=None):
    """x0: (B, T, F). w1: (F, H), b1: (1, H), w2: (H, C), b2: (1, C).
    Returns logits (B, C) float32."""
    B, T, F = x0.shape
    H = w1.shape[1]
    C = w2.shape[1]
    assert T >= 1
    itemsize = x0.dtype.itemsize
    inv_t = 1.0 / T  # static Python constant; applied in-kernel on the last step

    # ---- lane folding: make the streamed lane dim 128-dense for small F ------
    if F < 128 and (128 % F == 0):
        fold = 128 // F
    else:
        fold = 1
    F_lane = fold * F

    # ---- batch tiling ---------------------------------------------------------
    # B > 8: use b_tile=8 so nb >= 2 and the "parallel" axis shards across v7x's
    # two TensorCores.  B <= 8: one full-batch tile (padding batch 8x just to get
    # a second core would cost more HBM traffic than it recovers).
    if b_tile is None:
        b_tile = 8 if B > 8 else B
    B_pad = _round_up(B, b_tile)

    # ---- T tiling (in folded rows), sized against the *lane-padded* footprint -
    T_rows = -(-T // fold)
    if t_tile is None:
        target_bytes = 6 * 1024 * 1024            # per x buffer (double-buffered)
        lane_padded = _round_up(F_lane, 128)
        t_tile = max(8, target_bytes // max(1, b_tile * lane_padded * itemsize))
    t_tile = _round_up(min(t_tile, _round_up(T_rows, 8)), 8)
    T_rows_pad = _round_up(T_rows, t_tile)
    T_pad = T_rows_pad * fold

    # Zero-pad B/T tails: zeros contribute nothing to the running sum, and the
    # mean scale uses the true T, so no masking is required.
    if (B_pad != B) or (T_pad != T):
        x0 = jnp.pad(x0, ((0, B_pad - B), (0, T_pad - T), (0, 0)))
    # Lane-dense view: fold consecutive time steps into lanes (exact for a sum).
    x_r = x0.reshape(B_pad, T_rows_pad, F_lane)

    nb = B_pad // b_tile
    nt = T_rows_pad // t_tile

    # ---- kernel (closure over F, fold, inv_t) ---------------------------------
    def head_kernel(x_ref, w1_ref, b1_ref, w2_ref, b2_ref, out_ref, acc_ref):
        # x_ref: (b_tile, t_tile, F_lane); acc_ref: (b_tile, F_lane) f32 running sum.
        t = pl.program_id(1)

        @pl.when(t == 0)
        def _init():
            acc_ref[...] = jnp.zeros_like(acc_ref)

        # Partial sum over this T tile; accumulate in f32 regardless of input dtype.
        acc_ref[...] += jnp.sum(x_ref[...], axis=1, dtype=jnp.float32)

        @pl.when(t == pl.num_programs(1) - 1)
        def _finalize():
            acc = acc_ref[...]                                   # (b_tile, F_lane) f32
            # Combine the `fold` lane segments back to (b_tile, F) (exact sum),
            # then apply the 1/T mean scale in f32 (free VPU work, once per tile).
            pooled = acc[:, 0:F]
            for k in range(1, fold):
                pooled = pooled + acc[:, k * F:(k + 1) * F]
            pooled = pooled * inv_t                              # (b_tile, F)
            h = jnp.dot(pooled.astype(w1_ref.dtype), w1_ref[...],
                        preferred_element_type=jnp.float32)
            h = h + b1_ref[...].astype(jnp.float32)              # (b_tile, H)
            h = jnp.maximum(h, 0.0)                              # ReLU; dropout = identity (eval)
            logits = jnp.dot(h.astype(w2_ref.dtype), w2_ref[...],
                             preferred_element_type=jnp.float32)
            logits = logits + b2_ref[...].astype(jnp.float32)    # (b_tile, C)
            out_ref[...] = logits.astype(out_ref.dtype)

    cost = pl.CostEstimate(
        flops=B_pad * T_rows_pad * F_lane                 # pooling adds
        + 2 * B_pad * (F * H + H * C),                    # two tiny matmuls
        transcendentals=0,
        bytes_accessed=x_r.size * itemsize
        + w1.size * w1.dtype.itemsize + w2.size * w2.dtype.itemsize
        + b1.size * b1.dtype.itemsize + b2.size * b2.dtype.itemsize
        + B_pad * C * 4,
    )

    out = pl.pallas_call(
        head_kernel,
        out_shape=jax.ShapeDtypeStruct((B_pad, C), jnp.float32),
        grid_spec=pltpu.PrefetchScalarGridSpec(
            num_scalar_prefetch=0,
            grid=(nb, nt),
            in_specs=[
                pl.BlockSpec((b_tile, t_tile, F_lane), lambda b, t: (b, t, 0)),
                pl.BlockSpec((F, H), lambda b, t: (0, 0)),
                pl.BlockSpec((1, H), lambda b, t: (0, 0)),
                pl.BlockSpec((H, C), lambda b, t: (0, 0)),
                pl.BlockSpec((1, C), lambda b, t: (0, 0)),
            ],
            out_specs=pl.BlockSpec((b_tile, C), lambda b, t: (b, 0)),
            scratch_shapes=[pltpu.VMEM((b_tile, F_lane), jnp.float32)],
        ),
        compiler_params=pltpu.CompilerParams(
            dimension_semantics=("parallel", "arbitrary"),
            vmem_limit_bytes=32 * 1024 * 1024),
        cost_estimate=cost,
    )(x_r, w1, b1, w2, b2)

    if B_pad != B:
        out = out[:B]
    return out


if __name__ == "__main__":
    # Small shapes consistent with the module:
    #   batch=2, seq=8, num_features=32, hidden_size=32, num_labels=2
    B, T, F, H, C = 2, 8, 32, 32, 2

    key = jax.random.PRNGKey(0)
    kx, kw1, kb1, kw2, kb2 = jax.random.split(key, 5)

    # x mimics the PyTorch input: a tuple whose first element is (B, T, F)
    x0 = jax.random.normal(kx, (B, T, F), dtype=jnp.float32)
    x = (x0,)

    # Deterministic synthetic parameters (shapes from _Classifier(F, 2, H)).
    w1 = jax.random.normal(kw1, (F, H), dtype=jnp.float32) * 0.05
    b1 = jax.random.normal(kb1, (1, H), dtype=jnp.float32) * 0.05
    w2 = jax.random.normal(kw2, (H, C), dtype=jnp.float32) * 0.05
    b2 = jax.random.normal(kb2, (1, C), dtype=jnp.float32) * 0.05

    logits = head_forward(x[0], w1, b1, w2, b2)
    jax.block_until_ready(logits)

    # Pure-JAX reference check
    hs_ref = jnp.mean(x[0], axis=1)
    ref = jnp.maximum(hs_ref @ w1 + b1, 0.0) @ w2 + b2
    assert logits.shape == (B, C)
    assert jnp.allclose(logits, ref, atol=1e-5, rtol=1e-5)

    print("KERNEL_OK")
</pallas_src>

<mosaic_0001>
module attributes {stable_mosaic.version = 11 : i64} {
  func.func @head_kernel(%arg0: i32, %arg1: i32, %arg2: memref<2x8x128xf32, #tpu.memory_space<vmem>>, %arg3: memref<32x32xf32, #tpu.memory_space<vmem>>, %arg4: memref<1x32xf32, #tpu.memory_space<vmem>>, %arg5: memref<32x2xf32, #tpu.memory_space<vmem>>, %arg6: memref<1x2xf32, #tpu.memory_space<vmem>>, %arg7: memref<2x2xf32, #tpu.memory_space<vmem>>, %arg8: memref<2x128xf32, #tpu.memory_space<vmem>>) attributes {dimension_semantics = [#tpu.dimension_semantics<parallel>, #tpu.dimension_semantics<arbitrary>], iteration_bounds = array<i64: 1, 1>, scalar_prefetch = 0 : i64, scratch_operands = 1 : i64, tpu.core_type = #tpu.core_type<tc>, window_params = [{transform_indices = @transform_0, window_bounds = array<i64: 2, 8, 128>}, {pipeline_mode = #tpu.pipeline_mode<synchronous>, transform_indices = @transform_1, window_bounds = array<i64: 32, 32>}, {pipeline_mode = #tpu.pipeline_mode<synchronous>, transform_indices = @transform_2, window_bounds = array<i64: 1, 32>}, {pipeline_mode = #tpu.pipeline_mode<synchronous>, transform_indices = @transform_3, window_bounds = array<i64: 32, 2>}, {pipeline_mode = #tpu.pipeline_mode<synchronous>, transform_indices = @transform_4, window_bounds = array<i64: 1, 2>}, {transform_indices = @transform_5, window_bounds = array<i64: 2, 2>}]} {
    %c0_i32 = arith.constant 0 : i32
    %0 = arith.cmpi eq, %arg1, %c0_i32 : i32
    %1 = arith.extui %0 : i1 to i32
    %c0_i32_0 = arith.constant 0 : i32
    %2 = arith.cmpi ne, %1, %c0_i32_0 : i32
    scf.if %2 {
      %cst_9 = arith.constant 0.000000e+00 : f32
      %11 = vector.broadcast %cst_9 : f32 to vector<2x128xf32>
      %c0_10 = arith.constant 0 : index
      %c0_11 = arith.constant 0 : index
      %12 = vector.load %arg8[%c0_10, %c0_11] : memref<2x128xf32, #tpu.memory_space<vmem>>, vector<2x128xf32>
      tpu.vector_store %arg8[%c0_10, %c0_11], %11 {strides = array<i32>} : memref<2x128xf32, #tpu.memory_space<vmem>>, vector<2x128xf32>,
    } else {
    }
    %c0 = arith.constant 0 : index
    %c0_1 = arith.constant 0 : index
    %3 = vector.load %arg8[%c0, %c0_1] : memref<2x128xf32, #tpu.memory_space<vmem>>, vector<2x128xf32>
    %c0_2 = arith.constant 0 : index
    %c0_3 = arith.constant 0 : index
    %c0_4 = arith.constant 0 : index
    %4 = vector.load %arg2[%c0_2, %c0_3, %c0_4] : memref<2x8x128xf32, #tpu.memory_space<vmem>>, vector<2x8x128xf32>
    %cst = arith.constant dense<0.000000e+00> : vector<2x128xf32>
    %5 = vector.multi_reduction <add>, %4, %cst [1] : vector<2x8x128xf32> to vector<2x128xf32>
    %6 = arith.addf %3, %5 : vector<2x128xf32>
    %c0_5 = arith.constant 0 : index
    %c0_6 = arith.constant 0 : index
    %7 = vector.load %arg8[%c0_5, %c0_6] : memref<2x128xf32, #tpu.memory_space<vmem>>, vector<2x128xf32>
    tpu.vector_store %arg8[%c0_5, %c0_6], %6 {strides = array<i32>} : memref<2x128xf32, #tpu.memory_space<vmem>>, vector<2x128xf32>,
    %c0_i32_7 = arith.constant 0 : i32
    %8 = arith.cmpi eq, %arg1, %c0_i32_7 : i32
    %9 = arith.extui %8 : i1 to i32
    %c0_i32_8 = arith.constant 0 : i32
    %10 = arith.cmpi ne, %9, %c0_i32_8 : i32
    scf.if %10 {
      %c0_9 = arith.constant 0 : index
      %c0_10 = arith.constant 0 : index
      %11 = vector.load %arg8[%c0_9, %c0_10] : memref<2x128xf32, #tpu.memory_space<vmem>>, vector<2x128xf32>
      %12 = vector.extract_strided_slice %11 {offsets = [0, 0], sizes = [2, 32], strides = [1, 1]} : vector<2x128xf32> to vector<2x32xf32>
      %13 = vector.extract_strided_slice %11 {offsets = [0, 32], sizes = [2, 32], strides = [1, 1]} : vector<2x128xf32> to vector<2x32xf32>
      %14 = arith.addf %12, %13 : vector<2x32xf32>
      %15 = vector.extract_strided_slice %11 {offsets = [0, 64], sizes = [2, 32], strides = [1, 1]} : vector<2x128xf32> to vector<2x32xf32>
      %16 = arith.addf %14, %15 : vector<2x32xf32>
      %17 = vector.extract_strided_slice %11 {offsets = [0, 96], sizes = [2, 32], strides = [1, 1]} : vector<2x128xf32> to vector<2x32xf32>
      %18 = arith.addf %16, %17 : vector<2x32xf32>
      %cst_11 = arith.constant 1.250000e-01 : f32
      %19 = vector.broadcast %cst_11 : f32 to vector<2x32xf32>
      %20 = arith.mulf %18, %19 : vector<2x32xf32>
      %c0_12 = arith.constant 0 : index
      %c0_13 = arith.constant 0 : index
      %21 = vector.load %arg3[%c0_12, %c0_13] : memref<32x32xf32, #tpu.memory_space<vmem>>, vector<32x32xf32>
      %cst_14 = arith.constant dense<0.000000e+00> : vector<2x32xf32>
      %22 = tpu.matmul %20, %21, %cst_14 {dimension_numbers = #tpu.dot_dimension_numbers<[1], [0], [0], [1], [0, 0, 1, 1], [], []>} : vector<2x32xf32>, vector<32x32xf32>, vector<2x32xf32> -> vector<2x32xf32>
      %c0_15 = arith.constant 0 : index
      %c0_16 = arith.constant 0 : index
      %23 = vector.load %arg4[%c0_15, %c0_16] : memref<1x32xf32, #tpu.memory_space<vmem>>, vector<1x32xf32>
      %24 = vector.broadcast %23 : vector<1x32xf32> to vector<2x32xf32>
      %25 = arith.addf %22, %24 : vector<2x32xf32>
      %cst_17 = arith.constant 0.000000e+00 : f32
      %26 = vector.broadcast %cst_17 : f32 to vector<2x32xf32>
      %27 = arith.maximumf %25, %26 : vector<2x32xf32>
      %c0_18 = arith.constant 0 : index
      %c0_19 = arith.constant 0 : index
      %28 = vector.load %arg5[%c0_18, %c0_19] : memref<32x2xf32, #tpu.memory_space<vmem>>, vector<32x2xf32>
      %cst_20 = arith.constant dense<0.000000e+00> : vector<2x2xf32>
      %29 = tpu.matmul %27, %28, %cst_20 {dimension_numbers = #tpu.dot_dimension_numbers<[1], [0], [0], [1], [0, 0, 1, 1], [], []>} : vector<2x32xf32>, vector<32x2xf32>, vector<2x2xf32> -> vector<2x2xf32>
      %c0_21 = arith.constant 0 : index
      %c0_22 = arith.constant 0 : index
      %30 = vector.load %arg6[%c0_21, %c0_22] : memref<1x2xf32, #tpu.memory_space<vmem>>, vector<1x2xf32>
      %31 = vector.broadcast %30 : vector<1x2xf32> to vector<2x2xf32>
      %32 = arith.addf %29, %31 : vector<2x2xf32>
      %c0_23 = arith.constant 0 : index
      %c0_24 = arith.constant 0 : index
      %33 = vector.load %arg7[%c0_23, %c0_24] : memref<2x2xf32, #tpu.memory_space<vmem>>, vector<2x2xf32>
      tpu.vector_store %arg7[%c0_23, %c0_24], %32 {strides = array<i32>} : memref<2x2xf32, #tpu.memory_space<vmem>>, vector<2x2xf32>,
    } else {
    }
    return
  }
  func.func @transform_0(%arg0: i32, %arg1: i32) -> (i32, i32, i32) {
    %c0_i32 = arith.constant 0 : i32
    %c0_i32_0 = arith.constant 0 : i32
    return %arg0, %arg1, %c0_i32 : i32, i32, i32
  }
  func.func @transform_1(%arg0: i32, %arg1: i32) -> (i32, i32) {
    %c0_i32 = arith.constant 0 : i32
    %c0_i32_0 = arith.constant 0 : i32
    %c0_i32_1 = arith.constant 0 : i32
    return %c0_i32, %c0_i32_0 : i32, i32
  }
  func.func @transform_2(%arg0: i32, %arg1: i32) -> (i32, i32) {
    %c0_i32 = arith.constant 0 : i32
    %c0_i32_0 = arith.constant 0 : i32
    %c0_i32_1 = arith.constant 0 : i32
    return %c0_i32, %c0_i32_0 : i32, i32
  }
  func.func @transform_3(%arg0: i32, %arg1: i32) -> (i32, i32) {
    %c0_i32 = arith.constant 0 : i32
    %c0_i32_0 = arith.constant 0 : i32
    %c0_i32_1 = arith.constant 0 : i32
    return %c0_i32, %c0_i32_0 : i32, i32
  }
  func.func @transform_4(%arg0: i32, %arg1: i32) -> (i32, i32) {
    %c0_i32 = arith.constant 0 : i32
    %c0_i32_0 = arith.constant 0 : i32
    %c0_i32_1 = arith.constant 0 : i32
    return %c0_i32, %c0_i32_0 : i32, i32
  }
  func.func @transform_5(%arg0: i32, %arg1: i32) -> (i32, i32) {
    %c0_i32 = arith.constant 0 : i32
    %c0_i32_0 = arith.constant 0 : i32
    return %arg0, %c0_i32 : i32, i32
  }
}

</mosaic_0001>

<llo_original>
// kernel: tpu_custom_call.1
$region0: #{tpu_custom_call.1}
  #allocation0 [shape = 'u32[]', space=smem, size = 0x4, offset = 0x4, fixed_abs, tag = 'smem constant byte address 0x4 - core index']
  #allocation1 [shape = 'u32[72,128]{1,0:T(1,128)}', space=vmem, size = 0x9000, scoped, tag = 'internal scratch']
  #allocation2 [shape = 'f32[2,128]{1,0:T(2,128)}', space=vmem, size = 0x400, scoped, tag = 'scratch operand']
  %s0 = inlined_call_operand.hbm [shape: f32[2,8,128], index: 0, kind: input, shape index: {}]
  %s1 = inlined_call_operand.vmem [shape: f32[32,32], index: 1, kind: input, shape index: {}]
  %s2 = inlined_call_operand.vmem [shape: f32[1,32], index: 2, kind: input, shape index: {}]
  %s3 = inlined_call_operand.vmem [shape: f32[32,2], index: 3, kind: input, shape index: {}]
  %s4 = inlined_call_operand.vmem [shape: f32[1,2], index: 4, kind: input, shape index: {}]
  %s5 = inlined_call_operand.hbm [shape: f32[2,2], index: 5, kind: output, shape index: {}]
  %s6 = sld [smem:[#allocation0]]
  $region42: #{tpu_custom_call.1} parent=0
    _
  %s8 = ssub.s32 1, %s6
  %s9 = scalar_select 0, %s8, %s6
  $region1: #{tpu_custom_call.1} parent=0
    #allocation3 [shape = 'u8[8192]{0}', space=vmem, size = 0x2000, scoped, tag = 'input window, operand 0, single buffered']
    #allocation4 [shape = 's32[1]{0}', space=sflag, size = 0x4, scoped, tag = 'scoped memory for tpu_custom_call.1']
    #allocation5 [shape = 's32[1]{0}', space=sflag, size = 0x4, scoped, tag = 'scoped memory for tpu_custom_call.1']
    #allocation6 [shape = 'u8[1024]{0}', space=vmem, size = 0x400, scoped, tag = 'output window, operand 0, single buffered']
    %10 = vsyncpa [#allocation4], 0
    %11 = vsyncpa [#allocation5], 0
    // Predicated region
    $region2: #{tpu_custom_call.1} parent=1 // pred_check
      _
    $region3: #{tpu_custom_call.1} parent=1 // pred_check_branch
      %13 = sbr.rel (0) target = $region5
    $region4: #{tpu_custom_call.1} parent=1 // pred_region
      %15 = vsyncadd [#allocation4], 0
      %s16 = sshll.u32 %s0, 4
      %s17 = int_to_ptr.hbm [resolvable:$true] %s16
      %s18 = sshll.u32 [#allocation3], 4
      %s19 = int_to_ptr.vmem [resolvable:$true] %s18
      %24 = dma.hbm_to_vmem [thread:$0]  %s17, 256, %s19, [#allocation4], 128, 128, 8
    $region5: #{tpu_custom_call.1} parent=1 // pred_fallthru
      _
    // Predicated region
    $region6: #{tpu_custom_call.1} parent=1 // pred_check
      _
    $region7: #{tpu_custom_call.1} parent=1 // pred_check_branch
      %26 = sbr.rel (0) target = $region9
    $region8: #{tpu_custom_call.1} parent=1 // pred_region
      _
    $region9: #{tpu_custom_call.1} parent=1 // pred_fallthru
      _
    // Predicated region
    $region10: #{tpu_custom_call.1} parent=1 // pred_check
      _
    $region11: #{tpu_custom_call.1} parent=1 // pred_check_branch
      %28 = sbr.rel (0) target = $region13
    $region12: #{tpu_custom_call.1} parent=1 // pred_region
      _
    $region13: #{tpu_custom_call.1} parent=1 // pred_fallthru
      _
    // Predicated region
    $region14: #{tpu_custom_call.1} parent=1 // pred_check
      _
    $region15: #{tpu_custom_call.1} parent=1 // pred_check_branch
      %30 = sbr.rel (0) target = $region17
    $region16: #{tpu_custom_call.1} parent=1 // pred_region
      _
    $region17: #{tpu_custom_call.1} parent=1 // pred_fallthru
      _
    // Predicated region
    $region18: #{tpu_custom_call.1} parent=1 // pred_check
      _
    $region19: #{tpu_custom_call.1} parent=1 // pred_check_branch
      %32 = sbr.rel (0) target = $region21
    $region20: #{tpu_custom_call.1} parent=1 // pred_region
      _
    $region21: #{tpu_custom_call.1} parent=1 // pred_fallthru
      _
    // Predicated region
    $region22: #{tpu_custom_call.1} parent=1 // pred_check
      _
    $region23: #{tpu_custom_call.1} parent=1 // pred_check_branch
      %34 = sbr.rel (0) target = $region25
    $region24: #{tpu_custom_call.1} parent=1 // pred_region
      %36 = dma.done [#allocation4], 256
    $region25: #{tpu_custom_call.1} parent=1 // pred_fallthru
      _
    %p37 = scmp.eq.s32.totalorder 0, 0
    // Predicated region
    $region26: #{tpu_custom_call.1} parent=1 // pred_check
      %p38 = pneg %p37
    $region27: #{tpu_custom_call.1} parent=1 // pred_check_branch
      %40 = sbr.rel (%p38) target = $region29
    $region28: #{tpu_custom_call.1} parent=1 // pred_region
      %41 = vst [vmem:[#allocation2] sm:$0x3] 0.0
    $region29: #{tpu_custom_call.1} parent=1 // pred_fallthru
      _
    %v42 = vld [vmem:[#allocation2] sm:$0x3]
    %v43 = vld [vmem:[#allocation3] sm:$0xff]
    %v44 = vld [vmem:[#allocation3 + $0x8] sm:$0xff]
    %v45 = vrot.slane %v43, 4
    %v46 = vadd.f32 %v43, %v45
    %v47 = vrot.slane %v46, 2
    %v48 = vadd.f32 %v46, %v47
    %v49 = vrot.slane %v48, 1
    %v50 = vadd.f32 %v48, %v49
    %v51 = vrot.slane %v44, 4
    %v52 = vadd.f32 %v44, %v51
    %v53 = vrot.slane %v52, 2
    %v54 = vadd.f32 %v52, %v53
    %v55 = vrot.slane %v54, 1
    %v56 = vadd.f32 %v54, %v55
    %vm59 = vcmask 1041409
    %v60 = vsel %vm59, %v56, %v50
    %v62 = vadd.f32 %v42, %v60
    %63 = vst [vmem:[#allocation2] sm:$0x3] %v62
    // Predicated region
    $region30: #{tpu_custom_call.1} parent=1 // pred_check
      %p64 = pneg %p37
    $region31: #{tpu_custom_call.1} parent=1 // pred_check_branch
      %66 = sbr.rel (%p64) target = $region33
    $region32: #{tpu_custom_call.1} parent=1 // pred_region
      %v67 = vld [vmem:[#allocation2] sm:$0x3]
      %69 = vrot.lane.b32.xlu0 %v67, 96
      %v70 = vpop.permute.xlu0 %69
      %v72 = vadd.f32 %v67, %v70
      %73 = vrot.lane.b32.xlu0 %v67, 64
      %v74 = vpop.permute.xlu0 %73
      %v76 = vadd.f32 %v72, %v74
      %77 = vrot.lane.b32.xlu0 %v67, 32
      %v78 = vpop.permute.xlu0 %77
      %v80 = vadd.f32 %v76, %v78
      %v81 = vmul.f32 %v80, 0.125
      %v82 = vld [vmem:[%s1] sm:$0xff]
      %v83 = vld [vmem:[%s1 + $0x8] sm:$0xff]
      %v84 = vld [vmem:[%s1 + $0x10] sm:$0xff]
      %v85 = vld [vmem:[%s1 + $0x18] sm:$0xff]
      %v86 = vld [vmem:[%s2] sm:$0x1]
      %v88 = vperm.slane %v86, 0
      %vm90 = vcmask 261120
      %v92 = vsel %vm90, %v81, 0
      %94 = vmatpush.msra.mxu0 0.0
      %95 = vmatpush.msra.mxu0 0.0
      %96 = vmatpush.msra.mxu0 0.0
      %97 = vmatpush.msra.mxu0 0.0
      %98 = vmatpush.msra.mxu0 0.0
      %99 = vmatpush.msra.mxu0 0.0
      %100 = vmatpush.msra.mxu0 0.0
      %101 = vmatpush.msra.mxu0 0.0
      %102 = vmatpush.msra.mxu0 0.0
      %103 = vmatpush.msra.mxu0 0.0
      %104 = vmatpush.msra.mxu0 0.0
      %105 = vmatpush.msra.mxu0 0.0
      %106 = vmatpush.msra.mxu0 %v85
      %107 = vmatpush.msra.mxu0 %v84
      %108 = vmatpush.msra.mxu0 %v83
      %109 = vmatpush.msra.mxu0 %v82
      %110 = vmatmul.f32.gmra.mxu0 %v92
      %v111 = vpop.f32.mrf.mxu0
      %v112 = vadd.f32 %v88, %v111
      %113 = vdwg.mxu0
      %v114 = vmax.f32 %v112, 0.0
      %v115 = vld [vmem:[%s3] sm:$0xff]
      %v116 = vld [vmem:[%s3 + $0x8] sm:$0xff]
      %v117 = vld [vmem:[%s3 + $0x10] sm:$0xff]
      %v118 = vld [vmem:[%s3 + $0x18] sm:$0xff]
      %v119 = vld [vmem:[%s4] sm:$0x1]
      %v121 = vperm.slane %v119, 0
      %v124 = vsel %vm90, %v114, 0
      %126 = vmatpush.msra.mxu0 0.0
      %127 = vmatpush.msra.mxu0 0.0
      %128 = vmatpush.msra.mxu0 0.0
      %129 = vmatpush.msra.mxu0 0.0
      %130 = vmatpush.msra.mxu0 0.0
      %131 = vmatpush.msra.mxu0 0.0
      %132 = vmatpush.msra.mxu0 0.0
      %133 = vmatpush.msra.mxu0 0.0
      %134 = vmatpush.msra.mxu0 0.0
      %135 = vmatpush.msra.mxu0 0.0
      %136 = vmatpush.msra.mxu0 0.0
      %137 = vmatpush.msra.mxu0 0.0
      %138 = vmatpush.msra.mxu0 %v118
      %139 = vmatpush.msra.mxu0 %v117
      %140 = vmatpush.msra.mxu0 %v116
      %141 = vmatpush.msra.mxu0 %v115
      %142 = vmatmul.f32.gmra.mxu0 %v124
      %v143 = vpop.f32.mrf.mxu0
      %v144 = vadd.f32 %v121, %v143
      %145 = vdwg.mxu0
      %vm146 = vcmask 9216
      %147 = vst.msk [vmem:[#allocation6] sm:$0x3] %vm146, %v144
    $region33: #{tpu_custom_call.1} parent=1 // pred_fallthru
      _
    // Predicated region
    $region34: #{tpu_custom_call.1} parent=1 // pred_check
      _
    $region35: #{tpu_custom_call.1} parent=1 // pred_check_branch
      %149 = sbr.rel (0) target = $region37
    $region36: #{tpu_custom_call.1} parent=1 // pred_region
      %151 = vsyncadd [#allocation5], 0
      %s153 = sshll.u32 [#allocation6], 4
      %s154 = int_to_ptr.vmem [resolvable:$true] %s153
      %s155 = sshll.u32 %s5, 4
      %s156 = int_to_ptr.hbm [resolvable:$true] %s155
      %158 = dma.vmem_to_hbm [thread:$0]  %s154, 32, %s156, [#allocation5]
    $region37: #{tpu_custom_call.1} parent=1 // pred_fallthru
      _
    // Predicated region
    $region38: #{tpu_custom_call.1} parent=1 // pred_check
      _
    $region39: #{tpu_custom_call.1} parent=1 // pred_check_branch
      %160 = sbr.rel (0) target = $region41
    $region40: #{tpu_custom_call.1} parent=1 // pred_region
      %162 = dma.done [#allocation5], 32
    $region41: #{tpu_custom_call.1} parent=1 // pred_fallthru
      _
    %163 = vsyncpa [#allocation4], 1
    %164 = vsyncpa [#allocation5], 1

</llo_original>
